<compile_context>
chip_gen: v6e
topology: v6e:2x2x1
jax: 0.10.0
libtpu: 0.0.40
codegen_flags: <defaults>
</compile_context>

<pallas_src>
import functools

import jax
import jax.numpy as jnp
from jax import lax
from jax.experimental import pallas as pl
from jax.experimental.pallas import tpu as pltpu


def _ffn_kernel(x_ref, ln_w_ref, ln_b_ref, w1_ref, b1_ref, w2_ref, b2_ref,
                o_ref, xn_ref, acc_ref, *, eps):
    """One (row-tile, hidden-tile) grid step.

    x_ref:  (tm, dim)      row tile (constant across hidden axis)
    w1_ref: (dim, th)      hidden-tile of first linear weight
    b1_ref: (1, th)        hidden-tile of first linear bias
    w2_ref: (th, dim)      hidden-tile of second linear weight
    o_ref:  (tm, dim)      output row tile (resident across hidden axis)
    xn_ref: (tm, dim) f32  LayerNorm-ed rows (scratch, computed at j==0)
    acc_ref:(tm, dim) f32  accumulator for the second matmul
    """
    j = pl.program_id(1)

    @pl.when(j == 0)
    def _():
        # ---- LayerNorm over last dim (biased var, eps matches torch 1e-5) ----
        x = x_ref[...].astype(jnp.float32)
        mean = jnp.mean(x, axis=-1, keepdims=True)
        centered = x - mean
        var = jnp.mean(centered * centered, axis=-1, keepdims=True)
        inv = lax.rsqrt(var + eps)
        xn = centered * inv
        xn = (xn * ln_w_ref[...].astype(jnp.float32)
              + ln_b_ref[...].astype(jnp.float32))
        xn_ref[...] = xn
        # Initialize the accumulator with the second linear's bias.
        acc_ref[...] = jnp.broadcast_to(
            b2_ref[...].astype(jnp.float32), acc_ref.shape)

    # ---- Linear 1 (hidden tile): (tm, dim) @ (dim, th) + b1[:, th] ----
    w1 = w1_ref[...]
    h = jnp.dot(xn_ref[...].astype(w1.dtype), w1,
                preferred_element_type=jnp.float32)
    h = h + b1_ref[...].astype(jnp.float32)

    # ---- GELU (exact erf form, matching nn.GELU default), per hidden tile ----
    h = 0.5 * h * (1.0 + lax.erf(h * jnp.float32(0.7071067811865476)))

    # ---- Linear 2 (hidden tile): accumulate (tm, th) @ (th, dim) ----
    w2 = w2_ref[...]
    acc_ref[...] += jnp.dot(h.astype(w2.dtype), w2,
                            preferred_element_type=jnp.float32)

    @pl.when(j == pl.num_programs(1) - 1)
    def _():
        o_ref[...] = acc_ref[...].astype(o_ref.dtype)


def _pick_hidden_tile(hidden, target=512):
    """Largest multiple of 128 that divides `hidden` and is <= target,
    falling back to the full hidden dim (no tiling) if none exists."""
    if hidden % 128 != 0:
        return hidden
    th = (min(target, hidden) // 128) * 128
    while th >= 128:
        if hidden % th == 0:
            return th
        th -= 128
    return hidden


def feed_forward(x, params, *, tm=256, th_target=512, eps=1e-5):
    """Apply FeedForward to x of shape (..., dim)."""
    ln_w, ln_b, w1, b1, w2, b2 = (params["ln_w"], params["ln_b"],
                                  params["w1"], params["b1"],
                                  params["w2"], params["b2"])
    dim = x.shape[-1]
    hidden = w1.shape[1]
    orig_shape = x.shape
    xm = x.reshape(-1, dim)
    M = xm.shape[0]

    # Row tile: multiple of 8, capped so tiny inputs don't over-allocate.
    tm = min(tm, max(8, ((M + 7) // 8) * 8))
    grid_m = pl.cdiv(M, tm)

    # Hidden tile (multiple of 128 dividing hidden, else full hidden).
    th = _pick_hidden_tile(hidden, th_target)
    grid_h = hidden // th

    # Biases / LN params as 2-D (1, features) so they broadcast cleanly.
    ln_w2 = ln_w.reshape(1, dim)
    ln_b2 = ln_b.reshape(1, dim)
    b1_2 = b1.reshape(1, hidden)
    b2_2 = b2.reshape(1, dim)

    kernel = functools.partial(_ffn_kernel, eps=eps)

    itemsize = jnp.dtype(x.dtype).itemsize
    cost = pl.CostEstimate(
        flops=4 * M * dim * hidden,          # two matmuls, 2*M*dim*hidden each
        transcendentals=M * hidden,          # erf
        bytes_accessed=(M * dim * itemsize                      # x read
                        + M * dim * itemsize                    # out write
                        + w1.size * jnp.dtype(w1.dtype).itemsize
                        + w2.size * jnp.dtype(w2.dtype).itemsize
                        + (b1.size + b2.size + ln_w.size + ln_b.size) * 4),
    )

    out = pl.pallas_call(
        kernel,
        out_shape=jax.ShapeDtypeStruct((M, dim), x.dtype),
        grid_spec=pltpu.PrefetchScalarGridSpec(
            num_scalar_prefetch=0,
            grid=(grid_m, grid_h),
            in_specs=[
                pl.BlockSpec((tm, dim), lambda i, j: (i, 0)),    # x rows
                pl.BlockSpec((1, dim), lambda i, j: (0, 0)),     # ln weight
                pl.BlockSpec((1, dim), lambda i, j: (0, 0)),     # ln bias
                pl.BlockSpec((dim, th), lambda i, j: (0, j)),    # w1 tile
                pl.BlockSpec((1, th), lambda i, j: (0, j)),      # b1 tile
                pl.BlockSpec((th, dim), lambda i, j: (j, 0)),    # w2 tile
                pl.BlockSpec((1, dim), lambda i, j: (0, 0)),     # b2
            ],
            out_specs=pl.BlockSpec((tm, dim), lambda i, j: (i, 0)),
            scratch_shapes=[
                pltpu.VMEM((tm, dim), jnp.float32),   # LayerNorm-ed rows
                pltpu.VMEM((tm, dim), jnp.float32),   # f32 accumulator
            ],
        ),
        compiler_params=pltpu.CompilerParams(
            dimension_semantics=("parallel", "arbitrary")),
        cost_estimate=cost,
    )(xm, ln_w2, ln_b2, w1, b1_2, w2, b2_2)

    return out.reshape(orig_shape)


def init_feed_forward_params(key, dim, hidden_dim, dtype=jnp.float32):
    """Matches the PyTorch init_weights semantics:
       LayerNorm: weight=1, bias=0. Linear: xavier_uniform weight, zero bias."""
    k1, k2 = jax.random.split(key)

    def xavier_uniform(k, fan_in, fan_out):
        bound = (6.0 / (fan_in + fan_out)) ** 0.5
        # Torch Linear weight is (out, in); we store transposed (in, out).
        return jax.random.uniform(k, (fan_in, fan_out), dtype=dtype,
                                  minval=-bound, maxval=bound)

    return {
        "ln_w": jnp.ones((dim,), dtype),
        "ln_b": jnp.zeros((dim,), dtype),
        "w1": xavier_uniform(k1, dim, hidden_dim),
        "b1": jnp.zeros((hidden_dim,), dtype),
        "w2": xavier_uniform(k2, hidden_dim, dim),
        "b2": jnp.zeros((dim,), dtype),
    }


if __name__ == "__main__":
    key = jax.random.PRNGKey(0)
    kx, kp = jax.random.split(key)

    batch, seq, dim, hidden = 2, 8, 32, 64
    x = jax.random.normal(kx, (batch, seq, dim), dtype=jnp.float32)
    params = init_feed_forward_params(kp, dim, hidden)

    out = feed_forward(x, params)
    out = jax.block_until_ready(out)

    # Reference check in plain JAX (same math).
    xm = x.astype(jnp.float32)
    mean = xm.mean(-1, keepdims=True)
    var = ((xm - mean) ** 2).mean(-1, keepdims=True)
    xn = (xm - mean) / jnp.sqrt(var + 1e-5) * params["ln_w"] + params["ln_b"]
    h = xn @ params["w1"] + params["b1"]
    h = 0.5 * h * (1.0 + lax.erf(h / jnp.sqrt(2.0)))
    ref = h @ params["w2"] + params["b2"]
    assert out.shape == x.shape
    assert jnp.max(jnp.abs(out - ref)) < 1e-4

    print("KERNEL_OK")
</pallas_src>

<mosaic_0001>
module attributes {stable_mosaic.version = 11 : i64} {
  func.func @_ffn_kernel(%arg0: i32, %arg1: i32, %arg2: memref<16x32xf32, #tpu.memory_space<vmem>>, %arg3: memref<1x32xf32, #tpu.memory_space<vmem>>, %arg4: memref<1x32xf32, #tpu.memory_space<vmem>>, %arg5: memref<32x64xf32, #tpu.memory_space<vmem>>, %arg6: memref<1x64xf32, #tpu.memory_space<vmem>>, %arg7: memref<64x32xf32, #tpu.memory_space<vmem>>, %arg8: memref<1x32xf32, #tpu.memory_space<vmem>>, %arg9: memref<16x32xf32, #tpu.memory_space<vmem>>, %arg10: memref<16x32xf32, #tpu.memory_space<vmem>>, %arg11: memref<16x32xf32, #tpu.memory_space<vmem>>) attributes {dimension_semantics = [#tpu.dimension_semantics<parallel>, #tpu.dimension_semantics<arbitrary>], iteration_bounds = array<i64: 1, 1>, scalar_prefetch = 0 : i64, scratch_operands = 2 : i64, tpu.core_type = #tpu.core_type<tc>, window_params = [{transform_indices = @transform_0, window_bounds = array<i64: 16, 32>}, {pipeline_mode = #tpu.pipeline_mode<synchronous>, transform_indices = @transform_1, window_bounds = array<i64: 1, 32>}, {pipeline_mode = #tpu.pipeline_mode<synchronous>, transform_indices = @transform_2, window_bounds = array<i64: 1, 32>}, {transform_indices = @transform_3, window_bounds = array<i64: 32, 64>}, {transform_indices = @transform_4, window_bounds = array<i64: 1, 64>}, {transform_indices = @transform_5, window_bounds = array<i64: 64, 32>}, {pipeline_mode = #tpu.pipeline_mode<synchronous>, transform_indices = @transform_6, window_bounds = array<i64: 1, 32>}, {transform_indices = @transform_7, window_bounds = array<i64: 16, 32>}]} {
    %c0_i32 = arith.constant 0 : i32
    %0 = arith.cmpi eq, %arg1, %c0_i32 : i32
    %1 = arith.extui %0 : i1 to i32
    %c0_i32_0 = arith.constant 0 : i32
    %2 = arith.cmpi ne, %1, %c0_i32_0 : i32
    scf.if %2 {
      %c0_18 = arith.constant 0 : index
      %c0_19 = arith.constant 0 : index
      %25 = vector.load %arg2[%c0_18, %c0_19] : memref<16x32xf32, #tpu.memory_space<vmem>>, vector<16x32xf32>
      %cst_20 = arith.constant dense<0.000000e+00> : vector<16xf32>
      %26 = vector.multi_reduction <add>, %25, %cst_20 [1] : vector<16x32xf32> to vector<16xf32>
      %27 = vector.shape_cast %26 : vector<16xf32> to vector<16x1xf32>
      %cst_21 = arith.constant 3.200000e+01 : f32
      %28 = vector.broadcast %cst_21 : f32 to vector<16x1xf32>
      %29 = arith.divf %27, %28 : vector<16x1xf32>
      %30 = vector.broadcast %29 : vector<16x1xf32> to vector<16x32xf32>
      %31 = arith.subf %25, %30 : vector<16x32xf32>
      %32 = arith.mulf %31, %31 : vector<16x32xf32>
      %cst_22 = arith.constant dense<0.000000e+00> : vector<16xf32>
      %33 = vector.multi_reduction <add>, %32, %cst_22 [1] : vector<16x32xf32> to vector<16xf32>
      %34 = vector.shape_cast %33 : vector<16xf32> to vector<16x1xf32>
      %cst_23 = arith.constant 3.200000e+01 : f32
      %35 = vector.broadcast %cst_23 : f32 to vector<16x1xf32>
      %36 = arith.divf %34, %35 : vector<16x1xf32>
      %cst_24 = arith.constant 9.99999974E-6 : f32
      %37 = vector.broadcast %cst_24 : f32 to vector<16x1xf32>
      %38 = arith.addf %36, %37 : vector<16x1xf32>
      %39 = math.rsqrt %38 : vector<16x1xf32>
      %40 = vector.broadcast %39 : vector<16x1xf32> to vector<16x32xf32>
      %41 = arith.mulf %31, %40 : vector<16x32xf32>
      %c0_25 = arith.constant 0 : index
      %c0_26 = arith.constant 0 : index
      %42 = vector.load %arg3[%c0_25, %c0_26] : memref<1x32xf32, #tpu.memory_space<vmem>>, vector<1x32xf32>
      %43 = vector.broadcast %42 : vector<1x32xf32> to vector<16x32xf32>
      %44 = arith.mulf %41, %43 : vector<16x32xf32>
      %c0_27 = arith.constant 0 : index
      %c0_28 = arith.constant 0 : index
      %45 = vector.load %arg4[%c0_27, %c0_28] : memref<1x32xf32, #tpu.memory_space<vmem>>, vector<1x32xf32>
      %46 = vector.broadcast %45 : vector<1x32xf32> to vector<16x32xf32>
      %47 = arith.addf %44, %46 : vector<16x32xf32>
      %c0_29 = arith.constant 0 : index
      %c0_30 = arith.constant 0 : index
      %48 = vector.load %arg10[%c0_29, %c0_30] : memref<16x32xf32, #tpu.memory_space<vmem>>, vector<16x32xf32>
      tpu.vector_store %arg10[%c0_29, %c0_30], %47 {strides = array<i32>} : memref<16x32xf32, #tpu.memory_space<vmem>>, vector<16x32xf32>,
      %c0_31 = arith.constant 0 : index
      %c0_32 = arith.constant 0 : index
      %49 = vector.load %arg8[%c0_31, %c0_32] : memref<1x32xf32, #tpu.memory_space<vmem>>, vector<1x32xf32>
      %50 = vector.shape_cast %49 : vector<1x32xf32> to vector<1x32xf32>
      %51 = vector.broadcast %50 : vector<1x32xf32> to vector<16x32xf32>
      %c0_33 = arith.constant 0 : index
      %c0_34 = arith.constant 0 : index
      %52 = vector.load %arg11[%c0_33, %c0_34] : memref<16x32xf32, #tpu.memory_space<vmem>>, vector<16x32xf32>
      tpu.vector_store %arg11[%c0_33, %c0_34], %51 {strides = array<i32>} : memref<16x32xf32, #tpu.memory_space<vmem>>, vector<16x32xf32>,
    } else {
    }
    %c0 = arith.constant 0 : index
    %c0_1 = arith.constant 0 : index
    %3 = vector.load %arg5[%c0, %c0_1] : memref<32x64xf32, #tpu.memory_space<vmem>>, vector<32x64xf32>
    %c0_2 = arith.constant 0 : index
    %c0_3 = arith.constant 0 : index
    %4 = vector.load %arg10[%c0_2, %c0_3] : memref<16x32xf32, #tpu.memory_space<vmem>>, vector<16x32xf32>
    %cst = arith.constant dense<0.000000e+00> : vector<16x64xf32>
    %5 = tpu.matmul %4, %3, %cst {dimension_numbers = #tpu.dot_dimension_numbers<[1], [0], [0], [1], [0, 0, 1, 1], [], []>} : vector<16x32xf32>, vector<32x64xf32>, vector<16x64xf32> -> vector<16x64xf32>
    %c0_4 = arith.constant 0 : index
    %c0_5 = arith.constant 0 : index
    %6 = vector.load %arg6[%c0_4, %c0_5] : memref<1x64xf32, #tpu.memory_space<vmem>>, vector<1x64xf32>
    %7 = vector.broadcast %6 : vector<1x64xf32> to vector<16x64xf32>
    %8 = arith.addf %5, %7 : vector<16x64xf32>
    %cst_6 = arith.constant 5.000000e-01 : f32
    %9 = vector.broadcast %cst_6 : f32 to vector<16x64xf32>
    %10 = arith.mulf %9, %8 : vector<16x64xf32>
    %cst_7 = arith.constant 0.707106769 : f32
    %11 = vector.broadcast %cst_7 : f32 to vector<16x64xf32>
    %12 = arith.mulf %8, %11 : vector<16x64xf32>
    %13 = math.erf %12 : vector<16x64xf32>
    %cst_8 = arith.constant 1.000000e+00 : f32
    %14 = vector.broadcast %cst_8 : f32 to vector<16x64xf32>
    %15 = arith.addf %14, %13 : vector<16x64xf32>
    %16 = arith.mulf %10, %15 : vector<16x64xf32>
    %c0_9 = arith.constant 0 : index
    %c0_10 = arith.constant 0 : index
    %17 = vector.load %arg7[%c0_9, %c0_10] : memref<64x32xf32, #tpu.memory_space<vmem>>, vector<64x32xf32>
    %c0_11 = arith.constant 0 : index
    %c0_12 = arith.constant 0 : index
    %18 = vector.load %arg11[%c0_11, %c0_12] : memref<16x32xf32, #tpu.memory_space<vmem>>, vector<16x32xf32>
    %cst_13 = arith.constant dense<0.000000e+00> : vector<16x32xf32>
    %19 = tpu.matmul %16, %17, %cst_13 {dimension_numbers = #tpu.dot_dimension_numbers<[1], [0], [0], [1], [0, 0, 1, 1], [], []>} : vector<16x64xf32>, vector<64x32xf32>, vector<16x32xf32> -> vector<16x32xf32>
    %20 = arith.addf %18, %19 : vector<16x32xf32>
    %c0_14 = arith.constant 0 : index
    %c0_15 = arith.constant 0 : index
    %21 = vector.load %arg11[%c0_14, %c0_15] : memref<16x32xf32, #tpu.memory_space<vmem>>, vector<16x32xf32>
    tpu.vector_store %arg11[%c0_14, %c0_15], %20 {strides = array<i32>} : memref<16x32xf32, #tpu.memory_space<vmem>>, vector<16x32xf32>,
    %c0_i32_16 = arith.constant 0 : i32
    %22 = arith.cmpi eq, %arg1, %c0_i32_16 : i32
    %23 = arith.extui %22 : i1 to i32
    %c0_i32_17 = arith.constant 0 : i32
    %24 = arith.cmpi ne, %23, %c0_i32_17 : i32
    scf.if %24 {
      %c0_18 = arith.constant 0 : index
      %c0_19 = arith.constant 0 : index
      %25 = vector.load %arg11[%c0_18, %c0_19] : memref<16x32xf32, #tpu.memory_space<vmem>>, vector<16x32xf32>
      %c0_20 = arith.constant 0 : index
      %c0_21 = arith.constant 0 : index
      %26 = vector.load %arg9[%c0_20, %c0_21] : memref<16x32xf32, #tpu.memory_space<vmem>>, vector<16x32xf32>
      tpu.vector_store %arg9[%c0_20, %c0_21], %25 {strides = array<i32>} : memref<16x32xf32, #tpu.memory_space<vmem>>, vector<16x32xf32>,
    } else {
    }
    return
  }
  func.func @transform_0(%arg0: i32, %arg1: i32) -> (i32, i32) {
    %c0_i32 = arith.constant 0 : i32
    %c0_i32_0 = arith.constant 0 : i32
    return %arg0, %c0_i32 : i32, i32
  }
  func.func @transform_1(%arg0: i32, %arg1: i32) -> (i32, i32) {
    %c0_i32 = arith.constant 0 : i32
    %c0_i32_0 = arith.constant 0 : i32
    %c0_i32_1 = arith.constant 0 : i32
    return %c0_i32, %c0_i32_0 : i32, i32
  }
  func.func @transform_2(%arg0: i32, %arg1: i32) -> (i32, i32) {
    %c0_i32 = arith.constant 0 : i32
    %c0_i32_0 = arith.constant 0 : i32
    %c0_i32_1 = arith.constant 0 : i32
    return %c0_i32, %c0_i32_0 : i32, i32
  }
  func.func @transform_3(%arg0: i32, %arg1: i32) -> (i32, i32) {
    %c0_i32 = arith.constant 0 : i32
    %c0_i32_0 = arith.constant 0 : i32
    return %c0_i32, %arg1 : i32, i32
  }
  func.func @transform_4(%arg0: i32, %arg1: i32) -> (i32, i32) {
    %c0_i32 = arith.constant 0 : i32
    %c0_i32_0 = arith.constant 0 : i32
    return %c0_i32, %arg1 : i32, i32
  }
  func.func @transform_5(%arg0: i32, %arg1: i32) -> (i32, i32) {
    %c0_i32 = arith.constant 0 : i32
    %c0_i32_0 = arith.constant 0 : i32
    return %arg1, %c0_i32 : i32, i32
  }
  func.func @transform_6(%arg0: i32, %arg1: i32) -> (i32, i32) {
    %c0_i32 = arith.constant 0 : i32
    %c0_i32_0 = arith.constant 0 : i32
    %c0_i32_1 = arith.constant 0 : i32
    return %c0_i32, %c0_i32_0 : i32, i32
  }
  func.func @transform_7(%arg0: i32, %arg1: i32) -> (i32, i32) {
    %c0_i32 = arith.constant 0 : i32
    %c0_i32_0 = arith.constant 0 : i32
    return %arg0, %c0_i32 : i32, i32
  }
}

</mosaic_0001>

<llo_original>
// kernel: tpu_custom_call.1
$region0: #{tpu_custom_call.1}
  #allocation0 [shape = 'u32[]', space=smem, size = 0x4, offset = 0x4, fixed_abs, tag = 'smem constant byte address 0x4 - core index']
  #allocation1 [shape = 'u32[144,128]{1,0:T(1,128)}', space=vmem, size = 0x12000, scoped, tag = 'internal scratch']
  #allocation2 [shape = 'f32[16,32]{1,0:T(8,128)}', space=vmem, size = 0x2000, scoped, tag = 'scratch operand']
  #allocation3 [shape = 'f32[16,32]{1,0:T(8,128)}', space=vmem, size = 0x2000, scoped, tag = 'scratch operand']
  %s0 = inlined_call_operand.vmem [shape: f32[16,32], index: 0, kind: input, shape index: {}]
  %s1 = inlined_call_operand.vmem [shape: f32[1,32], index: 1, kind: input, shape index: {}]
  %s2 = inlined_call_operand.vmem [shape: f32[1,32], index: 2, kind: input, shape index: {}]
  %s3 = inlined_call_operand.vmem [shape: f32[32,64], index: 3, kind: input, shape index: {}]
  %s4 = inlined_call_operand.vmem [shape: f32[1,64], index: 4, kind: input, shape index: {}]
  %s5 = inlined_call_operand.vmem [shape: f32[64,32], index: 5, kind: input, shape index: {}]
  %s6 = inlined_call_operand.vmem [shape: f32[1,32], index: 6, kind: input, shape index: {}]
  %s7 = inlined_call_operand.hbm [shape: f32[16,32], index: 7, kind: output, shape index: {}]
  %s8 = sld [smem:[#allocation0]]
  $region46: #{tpu_custom_call.1} parent=0
    _
  %s10 = ssub.s32 1, %s8
  %s11 = scalar_select 0, %s10, %s8
  $region1: #{tpu_custom_call.1} parent=0
    #allocation4 [shape = 'u8[8192]{0}', space=vmem, size = 0x2000, scoped, tag = 'output window, operand 0, single buffered']
    #allocation5 [shape = 's32[1]{0}', space=sflag, size = 0x4, scoped, tag = 'scoped memory for tpu_custom_call.1']
    %12 = vsyncpa [#allocation5], 0
    // Predicated region
    $region2: #{tpu_custom_call.1} parent=1 // pred_check
      _
    $region3: #{tpu_custom_call.1} parent=1 // pred_check_branch
      %14 = sbr.rel (0) target = $region5
    $region4: #{tpu_custom_call.1} parent=1 // pred_region
      _
    $region5: #{tpu_custom_call.1} parent=1 // pred_fallthru
      _
    // Predicated region
    $region6: #{tpu_custom_call.1} parent=1 // pred_check
      _
    $region7: #{tpu_custom_call.1} parent=1 // pred_check_branch
      %16 = sbr.rel (0) target = $region9
    $region8: #{tpu_custom_call.1} parent=1 // pred_region
      _
    $region9: #{tpu_custom_call.1} parent=1 // pred_fallthru
      _
    // Predicated region
    $region10: #{tpu_custom_call.1} parent=1 // pred_check
      _
    $region11: #{tpu_custom_call.1} parent=1 // pred_check_branch
      %18 = sbr.rel (0) target = $region13
    $region12: #{tpu_custom_call.1} parent=1 // pred_region
      _
    $region13: #{tpu_custom_call.1} parent=1 // pred_fallthru
      _
    // Predicated region
    $region14: #{tpu_custom_call.1} parent=1 // pred_check
      _
    $region15: #{tpu_custom_call.1} parent=1 // pred_check_branch
      %20 = sbr.rel (0) target = $region17
    $region16: #{tpu_custom_call.1} parent=1 // pred_region
      _
    $region17: #{tpu_custom_call.1} parent=1 // pred_fallthru
      _
    // Predicated region
    $region18: #{tpu_custom_call.1} parent=1 // pred_check
      _
    $region19: #{tpu_custom_call.1} parent=1 // pred_check_branch
      %22 = sbr.rel (0) target = $region21
    $region20: #{tpu_custom_call.1} parent=1 // pred_region
      _
    $region21: #{tpu_custom_call.1} parent=1 // pred_fallthru
      _
    // Predicated region
    $region22: #{tpu_custom_call.1} parent=1 // pred_check
      _
    $region23: #{tpu_custom_call.1} parent=1 // pred_check_branch
      %24 = sbr.rel (0) target = $region25
    $region24: #{tpu_custom_call.1} parent=1 // pred_region
      _
    $region25: #{tpu_custom_call.1} parent=1 // pred_fallthru
      _
    // Predicated region
    $region26: #{tpu_custom_call.1} parent=1 // pred_check
      _
    $region27: #{tpu_custom_call.1} parent=1 // pred_check_branch
      %26 = sbr.rel (0) target = $region29
    $region28: #{tpu_custom_call.1} parent=1 // pred_region
      _
    $region29: #{tpu_custom_call.1} parent=1 // pred_fallthru
      _
    %p27 = scmp.eq.s32.totalorder 0, 0
    // Predicated region
    $region30: #{tpu_custom_call.1} parent=1 // pred_check
      %p28 = pneg %p27
    $region31: #{tpu_custom_call.1} parent=1 // pred_check_branch
      %30 = sbr.rel (%p28) target = $region33
    $region32: #{tpu_custom_call.1} parent=1 // pred_region
      %v31 = vld [vmem:[%s0] sm:$0xff]
      %v32 = vld [vmem:[%s0 + $0x8] sm:$0xff]
      %vm33 = vcmask 261120
      %v34 = vsel %vm33, %v31, 0.0
      %35 = vadd.xlane.f32.xlu0 %v34
      %v36 = vpop.xlane.xlu0 %35
      %v37 = vsel %vm33, %v32, 0.0
      %38 = vadd.xlane.f32.xlu0 %v37
      %v39 = vpop.xlane.xlu0 %38
      %v40 = vrcp.pop 32.0
      %v41 = vmul.f32 %v36, %v40
      %v42 = vmul.f32 %v39, %v40
      %v43 = vsub.f32 %v31, %v41
      %v44 = vsub.f32 %v32, %v42
      %v45 = vmul.f32 %v43, %v43
      %v46 = vmul.f32 %v44, %v44
      %v47 = vsel %vm33, %v45, 0.0
      %48 = vadd.xlane.f32.xlu0 %v47
      %v49 = vpop.xlane.xlu0 %48
      %v50 = vsel %vm33, %v46, 0.0
      %51 = vadd.xlane.f32.xlu0 %v50
      %v52 = vpop.xlane.xlu0 %51
      %v53 = vmul.f32 %v49, %v40
      %v54 = vmul.f32 %v52, %v40
      %v55 = vadd.f32 %v53, 1e-05
      %v56 = vadd.f32 %v54, 1e-05
      %v57 = vrsqrt.pop %v55
      %v58 = vrsqrt.pop %v56
      %v59 = vmul.f32 %v43, %v57
      %v60 = vmul.f32 %v44, %v58
      %v61 = vld [vmem:[%s1] sm:$0x1]
      %v63 = vlaneseq
      %v64 = vshrl.u32 %v63, 7
      %v65 = vsub.s32 0, %v64
      %v66 = vrot.slane %v61, %v65
      %v68 = vmul.f32 %v59, %v66
      %v69 = vmul.f32 %v60, %v66
      %v70 = vld [vmem:[%s2] sm:$0x1]
      %v72 = vlaneseq
      %v73 = vshrl.u32 %v72, 7
      %v74 = vsub.s32 0, %v73
      %v75 = vrot.slane %v70, %v74
      %v77 = vadd.f32 %v68, %v75
      %v78 = vadd.f32 %v69, %v75
      %79 = vst.msk [vmem:[#allocation2] sm:$0xff] %vm33, %v77
      %80 = vst.msk [vmem:[#allocation2 + $0x8] sm:$0xff] %vm33, %v78
      %v81 = vld [vmem:[%s6] sm:$0x1]
      %v83 = vlaneseq
      %v84 = vshrl.u32 %v83, 7
      %v85 = vsub.s32 0, %v84
      %v86 = vrot.slane %v81, %v85
      %88 = vst.msk [vmem:[#allocation3] sm:$0xff] %vm33, %v86
      %89 = vst.msk [vmem:[#allocation3 + $0x8] sm:$0xff] %vm33, %v86
    $region33: #{tpu_custom_call.1} parent=1 // pred_fallthru
      _
    %v90 = vld [vmem:[%s3] sm:$0xff]
    %v91 = vld [vmem:[%s3 + $0x8] sm:$0xff]
    %v92 = vld [vmem:[%s3 + $0x10] sm:$0xff]
    %v93 = vld [vmem:[%s3 + $0x18] sm:$0xff]
    %v94 = vld [vmem:[#allocation2] sm:$0xff]
    %v95 = vld [vmem:[#allocation2 + $0x8] sm:$0xff]
    %v96 = vld [vmem:[%s4] sm:$0x1]
    %v98 = vlaneseq
    %v99 = vshrl.u32 %v98, 7
    %v100 = vsub.s32 0, %v99
    %v101 = vrot.slane %v96, %v100
    %vm103 = vcmask 261120
    %v105 = vsel %vm103, %v94, 0
    %v108 = vsel %vm103, %v95, 0
    %110 = vmatprep.subr.mxu0 0.0
    %111 = vmatpush1.msra.mxu0 0.0
    %112 = vmatprep.subr.mxu0 0.0
    %113 = vmatpush1.msra.mxu0 0.0
    %114 = vmatprep.subr.mxu0 0.0
    %115 = vmatpush1.msra.mxu0 0.0
    %116 = vmatprep.subr.mxu0 0.0
    %117 = vmatpush1.msra.mxu0 0.0
    %118 = vmatprep.subr.mxu0 0.0
    %119 = vmatpush1.msra.mxu0 0.0
    %120 = vmatprep.subr.mxu0 0.0
    %121 = vmatpush1.msra.mxu0 0.0
    %122 = vmatprep.subr.mxu0 0.0
    %123 = vmatpush1.msra.mxu0 0.0
    %124 = vmatprep.subr.mxu0 0.0
    %125 = vmatpush1.msra.mxu0 0.0
    %126 = vmatprep.subr.mxu0 0.0
    %127 = vmatpush1.msra.mxu0 0.0
    %128 = vmatprep.subr.mxu0 0.0
    %129 = vmatpush1.msra.mxu0 0.0
    %130 = vmatprep.subr.mxu0 0.0
    %131 = vmatpush1.msra.mxu0 0.0
    %132 = vmatprep.subr.mxu0 0.0
    %133 = vmatpush1.msra.mxu0 0.0
    %134 = vmatprep.subr.mxu0 0.0
    %135 = vmatpush1.msra.mxu0 %v93
    %136 = vmatprep.subr.mxu0 0.0
    %137 = vmatpush1.msra.mxu0 %v92
    %138 = vmatprep.subr.mxu0 0.0
    %139 = vmatpush1.msra.mxu0 %v91
    %140 = vmatprep.subr.mxu0 0.0
    %141 = vmatpush1.msra.mxu0 %v90
    %142 = vmatprep.subr.mxu0 0.0
    %143 = vmatpush2.msra.mxu0 0.0
    %144 = vmatprep.subr.mxu0 0.0
    %145 = vmatpush2.msra.mxu0 0.0
    %146 = vmatprep.subr.mxu0 0.0
    %147 = vmatpush2.msra.mxu0 0.0
    %148 = vmatprep.subr.mxu0 0.0
    %149 = vmatpush2.msra.mxu0 0.0
    %150 = vmatprep.subr.mxu0 0.0
    %151 = vmatpush2.msra.mxu0 0.0
    %152 = vmatprep.subr.mxu0 0.0
    %153 = vmatpush2.msra.mxu0 0.0
    %154 = vmatprep.subr.mxu0 0.0
    %155 = vmatpush2.msra.mxu0 0.0
    %156 = vmatprep.subr.mxu0 0.0
    %157 = vmatpush2.msra.mxu0 0.0
    %158 = vmatprep.subr.mxu0 0.0
    %159 = vmatpush2.msra.mxu0 0.0
    %160 = vmatprep.subr.mxu0 0.0
    %161 = vmatpush2.msra.mxu0 0.0
    %162 = vmatprep.subr.mxu0 0.0
    %163 = vmatpush2.msra.mxu0 0.0
    %164 = vmatprep.subr.mxu0 0.0
    %165 = vmatpush2.msra.mxu0 0.0
    %166 = vmatprep.subr.mxu0 0.0
    %167 = vmatpush2.msra.mxu0 0.0
    %168 = vmatprep.subr.mxu0 0.0
    %169 = vmatpush2.msra.mxu0 0.0
    %170 = vmatprep.subr.mxu0 0.0
    %171 = vmatpush2.msra.mxu0 0.0
    %172 = vmatprep.subr.mxu0 0.0
    %173 = vmatpush2.msra.mxu0 0.0
    %174 = vmatprep.mubr.f32.mxu0 0.0
    %175 = vmatmul.mubr.f32.gmra.mxu0 %v105
    %v176 = vpop.f32.mrf.mxu0
    %v177 = vadd.f32 %v101, %v176
    %v178 = vpop.f32.mrf.mxu0
    %179 = vmatprep.mubr.f32.mxu0 0.0
    %180 = vmatmul.mubr.f32.gmra.mxu0 %v108
    %v181 = vpop.f32.mrf.mxu0
    %v182 = vadd.f32 %v101, %v181
    %v183 = vpop.f32.mrf.mxu0
    %184 = vdwg.mxu0
    %v185 = vmul.f32 %v177, 0.5
    %v186 = vmul.f32 %v182, 0.5
    %v187 = vmul.f32 %v177, 0.70710677
    %v188 = vmul.f32 %v182, 0.70710677
    %v189 = verf.f32.pop %v187
    %v190 = verf.f32.pop %v188
    %v191 = vadd.f32 %v189, 1.0
    %v192 = vadd.f32 %v190, 1.0
    %v193 = vmul.f32 %v185, %v191
    %v194 = vmul.f32 %v186, %v192
    %v195 = vld [vmem:[%s5] sm:$0xff]
    %v196 = vld [vmem:[%s5 + $0x8] sm:$0xff]
    %v197 = vld [vmem:[%s5 + $0x10] sm:$0xff]
    %v198 = vld [vmem:[%s5 + $0x18] sm:$0xff]
    %v199 = vld [vmem:[%s5 + $0x20] sm:$0xff]
    %v200 = vld [vmem:[%s5 + $0x28] sm:$0xff]
    %v201 = vld [vmem:[%s5 + $0x30] sm:$0xff]
    %v202 = vld [vmem:[%s5 + $0x38] sm:$0xff]
    %v203 = vld [vmem:[#allocation3] sm:$0xff]
    %v204 = vld [vmem:[#allocation3 + $0x8] sm:$0xff]
    %vm205 = vcmask 523264
    %v207 = vsel %vm205, %v193, 0
    %v210 = vsel %vm205, %v194, 0
    %212 = vmatprep.subr.mxu0 0.0
    %213 = vmatpush1.msra.mxu0 0.0
    %214 = vmatprep.subr.mxu0 0.0
    %215 = vmatpush1.msra.mxu0 0.0
    %216 = vmatprep.subr.mxu0 0.0
    %217 = vmatpush1.msra.mxu0 0.0
    %218 = vmatprep.subr.mxu0 0.0
    %219 = vmatpush1.msra.mxu0 0.0
    %220 = vmatprep.subr.mxu0 0.0
    %221 = vmatpush1.msra.mxu0 0.0
    %222 = vmatprep.subr.mxu0 0.0
    %223 = vmatpush1.msra.mxu0 0.0
    %224 = vmatprep.subr.mxu0 0.0
    %225 = vmatpush1.msra.mxu0 0.0
    %226 = vmatprep.subr.mxu0 0.0
    %227 = vmatpush1.msra.mxu0 0.0
    %228 = vmatprep.subr.mxu0 0.0
    %229 = vmatpush1.msra.mxu0 %v202
    %230 = vmatprep.subr.mxu0 0.0
    %231 = vmatpush1.msra.mxu0 %v201
    %232 = vmatprep.subr.mxu0 0.0
    %233 = vmatpush1.msra.mxu0 %v200
    %234 = vmatprep.subr.mxu0 0.0
    %235 = vmatpush1.msra.mxu0 %v199
    %236 = vmatprep.subr.mxu0 0.0
    %237 = vmatpush1.msra.mxu0 %v198
    %238 = vmatprep.subr.mxu0 0.0
    %239 = vmatpush1.msra.mxu0 %v197
    %240 = vmatprep.subr.mxu0 0.0
    %241 = vmatpush1.msra.mxu0 %v196
    %242 = vmatprep.subr.mxu0 0.0
    %243 = vmatpush1.msra.mxu0 %v195
    %244 = vmatprep.subr.mxu0 0.0
    %245 = vmatpush2.msra.mxu0 0.0
    %246 = vmatprep.subr.mxu0 0.0
    %247 = vmatpush2.msra.mxu0 0.0
    %248 = vmatprep.subr.mxu0 0.0
    %249 = vmatpush2.msra.mxu0 0.0
    %250 = vmatprep.subr.mxu0 0.0
    %251 = vmatpush2.msra.mxu0 0.0
    %252 = vmatprep.subr.mxu0 0.0
    %253 = vmatpush2.msra.mxu0 0.0
    %254 = vmatprep.subr.mxu0 0.0
    %255 = vmatpush2.msra.mxu0 0.0
    %256 = vmatprep.subr.mxu0 0.0
    %257 = vmatpush2.msra.mxu0 0.0
    %258 = vmatprep.subr.mxu0 0.0
    %259 = vmatpush2.msra.mxu0 0.0
    %260 = vmatprep.subr.mxu0 0.0
    %261 = vmatpush2.msra.mxu0 0.0
    %262 = vmatprep.subr.mxu0 0.0
    %263 = vmatpush2.msra.mxu0 0.0
    %264 = vmatprep.subr.mxu0 0.0
    %265 = vmatpush2.msra.mxu0 0.0
    %266 = vmatprep.subr.mxu0 0.0
    %267 = vmatpush2.msra.mxu0 0.0
    %268 = vmatprep.subr.mxu0 0.0
    %269 = vmatpush2.msra.mxu0 0.0
    %270 = vmatprep.subr.mxu0 0.0
    %271 = vmatpush2.msra.mxu0 0.0
    %272 = vmatprep.subr.mxu0 0.0
    %273 = vmatpush2.msra.mxu0 0.0
    %274 = vmatprep.subr.mxu0 0.0
    %275 = vmatpush2.msra.mxu0 0.0
    %276 = vmatprep.mubr.f32.mxu0 0.0
    %277 = vmatmul.mubr.f32.gmra.mxu0 %v207
    %v278 = vpop.f32.mrf.mxu0
    %v279 = vadd.f32 0.0, %v278
    %v280 = vpop.f32.mrf.mxu0
    %281 = vmatprep.mubr.f32.mxu0 0.0
    %282 = vmatmul.mubr.f32.gmra.mxu0 %v210
    %v283 = vpop.f32.mrf.mxu0
    %v284 = vadd.f32 0.0, %v283
    %v285 = vpop.f32.mrf.mxu0
    %286 = vdwg.mxu0
    %v287 = vadd.f32 %v203, %v279
    %v288 = vadd.f32 %v204, %v284
    %289 = vst.msk [vmem:[#allocation3] sm:$0xff] %vm103, %v287
    %290 = vst.msk [vmem:[#allocation3 + $0x8] sm:$0xff] %vm103, %v288
    // Predicated region
    $region34: #{tpu_custom_call.1} parent=1 // pred_check
      %p291 = pneg %p27
    $region35: #{tpu_custom_call.1} parent=1 // pred_check_branch
      %293 = sbr.rel (%p291) target = $region37
    $region36: #{tpu_custom_call.1} parent=1 // pred_region
      %v294 = vld [vmem:[#allocation3] sm:$0xff]
      %v295 = vld [vmem:[#allocation3 + $0x8] sm:$0xff]
      %296 = vst.msk [vmem:[#allocation4] sm:$0xff] %vm103, %v294
      %297 = vst.msk [vmem:[#allocation4 + $0x8] sm:$0xff] %vm103, %v295
    $region37: #{tpu_custom_call.1} parent=1 // pred_fallthru
      _
    // Predicated region
    $region38: #{tpu_custom_call.1} parent=1 // pred_check
      _
    $region39: #{tpu_custom_call.1} parent=1 // pred_check_branch
      %299 = sbr.rel (0) target = $region41
    $region40: #{tpu_custom_call.1} parent=1 // pred_region
      %s301 = ssub.s32 256, 256
      %302 = vsyncadd [#allocation5], %s301
      %s303 = sshll.u32 [#allocation4], 4
      %s304 = int_to_ptr.vmem [resolvable:$true] %s303
      %309 = dma.vmem_to_hbm [thread:$0]  %s304, 256, %s7, [#allocation5], 128, 128, 8
    $region41: #{tpu_custom_call.1} parent=1 // pred_fallthru
      _
    // Predicated region
    $region42: #{tpu_custom_call.1} parent=1 // pred_check
      _
    $region43: #{tpu_custom_call.1} parent=1 // pred_check_branch
      %311 = sbr.rel (0) target = $region45
    $region44: #{tpu_custom_call.1} parent=1 // pred_region
      %312 = dma.done [#allocation5], 256
    $region45: #{tpu_custom_call.1} parent=1 // pred_fallthru
      _
    %313 = vsyncpa [#allocation5], 1

</llo_original>
